<compile_context>
chip_gen: v7x
topology: tpu7x:2x2x1
jax: 0.10.0
libtpu: 0.0.40
codegen_flags: <defaults>
</compile_context>

<pallas_src>
import functools

import jax
import jax.numpy as jnp
from jax.experimental import pallas as pl
from jax.experimental.pallas import tpu as pltpu


def _round_up(x, m):
    return ((x + m - 1) // m) * m


# ----------------------------------------------------------------------------
# Optional single-buffering of constant operands (weight / bias).
# pipeline_mode=pl.Buffered(1) is probed once (eagerly, outside any trace) and cached.
# ----------------------------------------------------------------------------
_BUFFERED_CONST_OK = None


def _probe_buffered_const():
    global _BUFFERED_CONST_OK
    if _BUFFERED_CONST_OK is None:
        try:
            with jax.ensure_compile_time_eval():
                spec = pl.BlockSpec((8, 128), lambda i: (0, 0),
                                    pipeline_mode=pl.Buffered(1))

                def _copy(x_ref, o_ref):
                    o_ref[...] = x_ref[...]

                fn = pl.pallas_call(
                    _copy,
                    out_shape=jax.ShapeDtypeStruct((16, 128), jnp.float32),
                    grid=(2,),
                    in_specs=[spec],
                    out_specs=pl.BlockSpec((8, 128), lambda i: (i, 0)),
                )
                jax.block_until_ready(fn(jnp.zeros((8, 128), jnp.float32)))
            _BUFFERED_CONST_OK = True
        except Exception:
            _BUFFERED_CONST_OK = False
    return _BUFFERED_CONST_OK


def _const_spec(shape):
    """BlockSpec for a grid-invariant operand; single-buffered when supported."""
    index_map = lambda i: (0,) * len(shape)
    if _probe_buffered_const():
        return pl.BlockSpec(shape, index_map, pipeline_mode=pl.Buffered(1))
    return pl.BlockSpec(shape, index_map)


# ----------------------------------------------------------------------------
# Pallas kernel: fused residual-add + folded ComplexProjection + de-normalization.
#
#   ComplexProjection(x) with x = xr + i*xi is linear in (xr, xi):
#     real = xr@wr - xi@wi + (br - bi)
#     imag = xr@wi + xi@wr + (br + bi)
#     out  = [real | imag] @ wo + bo
#          = xr @ w_top + xi @ w_bot + b_eff
#   with  w_top = wr@wo[:D] + wi@wo[D:],  w_bot = wr@wo[D:] - wi@wo[:D]
#         b_eff = (br-bi)@wo[:D] + (br+bi)@wo[D:] + bo
#   (folded once at parameter-prep time, lane-padded to Ppad = round_up(P, 128)).
#   The residual add (enc_out + enc_in) and the per-row de-normalization
#   (out * stdev + mean) are fused in.
# ----------------------------------------------------------------------------
def _fused_projection_kernel(eo_r_ref, eo_i_ref, ei_r_ref, ei_i_ref,
                             wt_ref, wb_ref, b_ref, s_ref, m_ref, out_ref):
    xr = eo_r_ref[...] + ei_r_ref[...]                        # [tm, D]
    xi = eo_i_ref[...] + ei_i_ref[...]                        # [tm, D]
    acc = jnp.dot(xr, wt_ref[...], preferred_element_type=jnp.float32)
    acc = acc + jnp.dot(xi, wb_ref[...], preferred_element_type=jnp.float32)
    out_ref[...] = ((acc + b_ref[...]) * s_ref[...] + m_ref[...]).astype(out_ref.dtype)


def _choose_tm(n_rows, tm_max=512):
    """Row tile: large (multiple of 128) for big N, >=2 grid steps when possible
    so the "parallel" grid axis can shard across v7x's two TensorCores."""
    half = -(-n_rows // 2)
    if n_rows >= 2 * tm_max:
        tm = tm_max
    elif half >= 128:
        tm = _round_up(half, 128)
    else:
        tm = _round_up(max(half, 8), 16)        # bf16 sublane packing
    return max(8, min(tm, tm_max, _round_up(n_rows, 8)))


def fold_projection_params(wr, wi, br, bi, wo, bo):
    """Fold the three Linear layers of ComplexProjection into w_top/w_bot/b_eff.
    Call ONCE at parameter-load time (outside jit) — hoisted off the per-call path."""
    D = wr.shape[0]
    P = wo.shape[1]
    Ppad = _round_up(P, 128)                    # lane-dense output columns
    w_top = wr @ wo[:D] + wi @ wo[D:]           # [D, P]
    w_bot = wr @ wo[D:] - wi @ wo[:D]           # [D, P]
    b_eff = (br - bi) @ wo[:D] + (br + bi) @ wo[D:] + bo
    pad = ((0, 0), (0, Ppad - P))
    return dict(
        w_top=jnp.pad(w_top, pad).astype(jnp.bfloat16),
        w_bot=jnp.pad(w_bot, pad).astype(jnp.bfloat16),
        b_eff=jnp.pad(b_eff, (0, Ppad - P)).reshape(1, Ppad).astype(jnp.float32),
    )


def fused_residual_projection_denorm(eo_r, eo_i, ei_r, ei_i,
                                     w_top, w_bot, b_eff,
                                     scale, shift, *, pred_len,
                                     out_dtype=jnp.float32,
                                     force_pallas=False,
                                     min_mxu_work=1 << 22):
    """(enc_out + enc_in) -> ComplexProjection -> (out * scale + shift), fused.

    eo_*, ei_*: [B, C, D] real/imag latents (bf16 preferred — produced directly by the
    layer norm so no extra cast pass).  scale/shift: [B, C] per-row de-norm factors.
    Returns [B, C, pred_len] in `out_dtype`.
    """
    B, C, D = eo_r.shape
    N = B * C
    Ppad = w_top.shape[1]

    # Free reshapes (contiguous) — no HBM copies.
    xr_o = eo_r.reshape(N, D)
    xi_o = eo_i.reshape(N, D)
    xr_i = ei_r.reshape(N, D)
    xi_i = ei_i.reshape(N, D)
    s = scale.reshape(N, 1).astype(jnp.float32)
    m = shift.reshape(N, 1).astype(jnp.float32)

    # Small-problem fallback: at tiny N*2D*Ppad the pallas_call launch/step overhead
    # exceeds the work; let XLA fuse it.
    if not force_pallas and N * 2 * D * Ppad < min_mxu_work:
        acc = (jnp.dot(xr_o + xr_i, w_top, preferred_element_type=jnp.float32)
               + jnp.dot(xi_o + xi_i, w_bot, preferred_element_type=jnp.float32)
               + b_eff)
        out = acc * s + m
        return out[:, :pred_len].astype(out_dtype).reshape(B, C, pred_len)

    tm = _choose_tm(N)
    grid = (pl.cdiv(N, tm),)                    # partial last block handled by Pallas

    itemsize_in = jnp.dtype(xr_o.dtype).itemsize
    cost = pl.CostEstimate(
        flops=2 * N * (2 * D) * Ppad,
        transcendentals=0,
        bytes_accessed=(4 * N * D * itemsize_in            # four row streams
                        + 2 * D * Ppad * 2 + Ppad * 4      # folded weights + bias
                        + 2 * N * 4                        # scale / shift
                        + N * Ppad * jnp.dtype(out_dtype).itemsize))

    row_spec = lambda: pl.BlockSpec((tm, D), lambda i: (i, 0))
    out = pl.pallas_call(
        _fused_projection_kernel,
        out_shape=jax.ShapeDtypeStruct((N, Ppad), out_dtype),
        grid=grid,
        in_specs=[
            row_spec(), row_spec(), row_spec(), row_spec(),   # eo_r, eo_i, ei_r, ei_i
            _const_spec((D, Ppad)),                           # w_top (grid-invariant)
            _const_spec((D, Ppad)),                           # w_bot (grid-invariant)
            _const_spec((1, Ppad)),                           # b_eff (grid-invariant)
            pl.BlockSpec((tm, 1), lambda i: (i, 0)),          # scale rows
            pl.BlockSpec((tm, 1), lambda i: (i, 0)),          # shift rows
        ],
        out_specs=pl.BlockSpec((tm, Ppad), lambda i: (i, 0)), # lane-dense store
        compiler_params=pltpu.CompilerParams(
            dimension_semantics=("parallel",),
            vmem_limit_bytes=32 * 1024 * 1024),
        cost_estimate=cost,
    )(xr_o, xi_o, xr_i, xi_i, w_top, w_bot, b_eff, s, m)

    if Ppad != pred_len:
        out = out[:, :pred_len]
    return out.reshape(B, C, pred_len)


# ----------------------------------------------------------------------------
# JAX glue pieces (definitions not provided in the PyTorch source snippet)
# ----------------------------------------------------------------------------
def complex_layer_norm(xr, xi, eps=1e-5, out_dtype=jnp.bfloat16):
    # TODO(synk): ComplexLayerNorm source not provided; assuming zero-mean / unit-power
    # normalization of the complex values over the last (d_model) axis.
    # Outputs bf16 so the downstream Pallas kernel reads half the bytes with no extra
    # cast pass (the cast fuses into this normalization).
    xr = xr.astype(jnp.float32)
    xi = xi.astype(jnp.float32)
    mr = xr.mean(-1, keepdims=True)
    mi = xi.mean(-1, keepdims=True)
    cr, ci = xr - mr, xi - mi
    var = (cr * cr + ci * ci).mean(-1, keepdims=True)
    inv = jax.lax.rsqrt(var + eps)
    return (cr * inv).astype(out_dtype), (ci * inv).astype(out_dtype)


def freq_complex_embedding(x_enc, we_r, we_i, be_r, be_i):
    # TODO(synk): DataEmbedding_FreqComplex source not provided; implemented as rfft over
    # time followed by a complex Linear(freq_len -> d_model), per channel (x_mark unused).
    xf = jnp.fft.rfft(x_enc, axis=1)                 # [B, F, C] complex
    xf = jnp.transpose(xf, (0, 2, 1))                # [B, C, F]
    xr = jnp.real(xf).astype(jnp.float32)
    xi = jnp.imag(xf).astype(jnp.float32)
    er = xr @ we_r - xi @ we_i + be_r                # [B, C, D]
    ei = xr @ we_i + xi @ we_r + be_i
    return er, ei


def frequency_domain_filter_layer(xr, xi):
    # TODO(synk): FrequencyDomainFilterLayer source not provided; identity pass-through.
    return xr, xi


# ----------------------------------------------------------------------------
# Parameters (deterministic in-script init, PyTorch-Linear-style uniform)
# ----------------------------------------------------------------------------
def init_params(key, seq_len, d_model, pred_len):
    freq_len = seq_len // 2 + 1
    ks = jax.random.split(key, 10)

    def lin(kw, kb, fan_in, fan_out):
        bound = 1.0 / jnp.sqrt(fan_in)
        w = jax.random.uniform(kw, (fan_in, fan_out), jnp.float32, -bound, bound)
        b = jax.random.uniform(kb, (fan_out,), jnp.float32, -bound, bound)
        return w, b

    we_r, be_r = lin(ks[0], ks[1], freq_len, d_model)   # embedding (complex linear)
    we_i, be_i = lin(ks[2], ks[3], freq_len, d_model)
    wr, br = lin(ks[4], ks[5], d_model, d_model)        # ComplexProjection.linear_real
    wi, bi = lin(ks[6], ks[7], d_model, d_model)        # ComplexProjection.linear_imag
    wo, bo = lin(ks[8], ks[9], 2 * d_model, pred_len)   # ComplexProjection.linear_out
    return dict(we_r=we_r, we_i=we_i, be_r=be_r, be_i=be_i,
                wr=wr, wi=wi, br=br, bi=bi, wo=wo, bo=bo)


# ----------------------------------------------------------------------------
# Model forward (mirrors Model.forward)
# ----------------------------------------------------------------------------
@functools.partial(jax.jit,
                   static_argnames=("e_layers", "pred_len", "c_out", "use_norm",
                                    "force_pallas"))
def model_forward(x_enc, params, proj, *, e_layers, pred_len, c_out,
                  use_norm=True, force_pallas=False):
    B, _, C = x_enc.shape

    if use_norm:
        means = x_enc.mean(axis=1, keepdims=True)
        x_enc = x_enc - means
        # jnp.var (ddof=0) matches torch.var(..., unbiased=False) in the reference.
        stdev = jnp.sqrt(jnp.var(x_enc, axis=1, keepdims=True) + 1e-5)
        x_enc = x_enc / stdev
        scale = stdev[:, 0, :]                     # [B, C] per-row de-norm factors
        shift = means[:, 0, :]
    else:
        scale = jnp.ones((B, C), jnp.float32)
        shift = jnp.zeros((B, C), jnp.float32)

    er, ei = freq_complex_embedding(x_enc, params["we_r"], params["we_i"],
                                    params["be_r"], params["be_i"])
    enc_in_r, enc_in_i = complex_layer_norm(er, ei)          # bf16

    enc_out_r, enc_out_i = enc_in_r, enc_in_i
    for _ in range(e_layers):
        # NOTE: reference code feeds enc_in to every layer (not the previous enc_out).
        enc_out_r, enc_out_i = frequency_domain_filter_layer(enc_in_r, enc_in_i)
        enc_out_r, enc_out_i = complex_layer_norm(enc_out_r, enc_out_i)

    # Hot path: residual add + ComplexProjection + de-norm as one fused Pallas kernel.
    dec_out = fused_residual_projection_denorm(
        enc_out_r, enc_out_i, enc_in_r, enc_in_i,
        proj["w_top"], proj["w_bot"], proj["b_eff"],
        scale, shift, pred_len=pred_len,
        force_pallas=force_pallas)                            # [B, C, pred_len] f32

    dec_out = jnp.transpose(dec_out, (0, 2, 1))[:, :, :c_out]  # [B, pred_len, c_out]
    return dec_out[:, -pred_len:, :]


# ----------------------------------------------------------------------------
if __name__ == "__main__":
    # ---- 1) End-to-end forward at small, module-consistent shapes -------------------
    # B=2, seq_len=16, enc_in=c_out=4, d_model=32, pred_len=8, e_layers=2, use_norm=True.
    B, L, C = 2, 16, 4
    d_model, pred_len, e_layers = 32, 8, 2

    key = jax.random.PRNGKey(0)
    k_x, k_p = jax.random.split(key, 2)
    x_enc = jax.random.normal(k_x, (B, L, C), jnp.float32)
    # x_mark_enc / x_dec / x_mark_dec are unused by the DataEmbedding_FreqComplex path.

    params = init_params(k_p, L, d_model, pred_len)
    proj = fold_projection_params(params["wr"], params["wi"], params["br"],
                                  params["bi"], params["wo"], params["bo"])

    out = model_forward(x_enc, params, proj, e_layers=e_layers, pred_len=pred_len,
                        c_out=C, use_norm=True, force_pallas=True)
    out = jax.block_until_ready(out)
    assert out.shape == (B, pred_len, C), out.shape
    assert bool(jnp.all(jnp.isfinite(out)))

    # ---- 2) Direct Pallas-kernel check at a larger, awkward shape --------------------
    # N = 3*37 = 111 rows (multi-step grid + partial last tile), P = 96 (lane padding).
    Bv, Cv, Dv, Pv = 3, 37, 64, 96
    kk = jax.random.split(jax.random.PRNGKey(1), 12)
    eo_r = jax.random.normal(kk[0], (Bv, Cv, Dv), jnp.float32)
    eo_i = jax.random.normal(kk[1], (Bv, Cv, Dv), jnp.float32)
    ei_r = jax.random.normal(kk[2], (Bv, Cv, Dv), jnp.float32)
    ei_i = jax.random.normal(kk[3], (Bv, Cv, Dv), jnp.float32)
    bound = 1.0 / jnp.sqrt(Dv)
    wr = jax.random.uniform(kk[4], (Dv, Dv), jnp.float32, -bound, bound)
    wi = jax.random.uniform(kk[5], (Dv, Dv), jnp.float32, -bound, bound)
    br = jax.random.uniform(kk[6], (Dv,), jnp.float32, -bound, bound)
    bi = jax.random.uniform(kk[7], (Dv,), jnp.float32, -bound, bound)
    wo = jax.random.uniform(kk[8], (2 * Dv, Pv), jnp.float32, -bound, bound)
    bo = jax.random.uniform(kk[9], (Pv,), jnp.float32, -bound, bound)
    scale_t = jax.random.uniform(kk[10], (Bv, Cv), jnp.float32, 0.5, 2.0)
    shift_t = jax.random.normal(kk[11], (Bv, Cv), jnp.float32)

    proj_t = fold_projection_params(wr, wi, br, bi, wo, bo)
    eo_r16, eo_i16 = eo_r.astype(jnp.bfloat16), eo_i.astype(jnp.bfloat16)
    ei_r16, ei_i16 = ei_r.astype(jnp.bfloat16), ei_i.astype(jnp.bfloat16)

    got = fused_residual_projection_denorm(
        eo_r16, eo_i16, ei_r16, ei_i16,
        proj_t["w_top"], proj_t["w_bot"], proj_t["b_eff"],
        scale_t, shift_t, pred_len=Pv, force_pallas=True)
    got = jax.block_until_ready(got)

    # Pure-JAX reference of (enc_out + enc_in) -> ComplexProjection -> de-norm, fed the
    # same bf16-rounded latents with unfolded f32 weights (validates fold + kernel).
    xr = (eo_r16 + ei_r16).astype(jnp.float32)
    xi = (eo_i16 + ei_i16).astype(jnp.float32)
    real = xr @ wr - xi @ wi + (br - bi)
    imag = xr @ wi + xi @ wr + (br + bi)
    ref = jnp.concatenate([real, imag], axis=-1) @ wo + bo
    ref = ref * scale_t[..., None] + shift_t[..., None]

    assert got.shape == (Bv, Cv, Pv), got.shape
    err = float(jnp.max(jnp.abs(got.astype(jnp.float32) - ref)))
    assert err < 0.08, f"fused kernel mismatch vs reference: max abs err = {err}"

    print("KERNEL_OK")
</pallas_src>

<mosaic_0001>
module attributes {stable_mosaic.version = 11 : i64} {
  func.func @_fused_projection_kernel(%arg0: i32, %arg1: memref<8x32xbf16, #tpu.memory_space<vmem>>, %arg2: memref<8x32xbf16, #tpu.memory_space<vmem>>, %arg3: memref<8x32xbf16, #tpu.memory_space<vmem>>, %arg4: memref<8x32xbf16, #tpu.memory_space<vmem>>, %arg5: memref<32x128xbf16, #tpu.memory_space<vmem>>, %arg6: memref<32x128xbf16, #tpu.memory_space<vmem>>, %arg7: memref<1x128xf32, #tpu.memory_space<vmem>>, %arg8: memref<8x1xf32, #tpu.memory_space<vmem>>, %arg9: memref<8x1xf32, #tpu.memory_space<vmem>>, %arg10: memref<8x128xf32, #tpu.memory_space<vmem>>) attributes {dimension_semantics = [#tpu.dimension_semantics<parallel>], iteration_bounds = array<i64: 1>, scalar_prefetch = 0 : i64, scratch_operands = 0 : i64, tpu.core_type = #tpu.core_type<tc>, window_params = [{transform_indices = @transform_0, window_bounds = array<i64: 8, 32>}, {transform_indices = @transform_1, window_bounds = array<i64: 8, 32>}, {transform_indices = @transform_2, window_bounds = array<i64: 8, 32>}, {transform_indices = @transform_3, window_bounds = array<i64: 8, 32>}, {pipeline_mode = #tpu.pipeline_mode<synchronous>, transform_indices = @transform_4, window_bounds = array<i64: 32, 128>}, {pipeline_mode = #tpu.pipeline_mode<synchronous>, transform_indices = @transform_5, window_bounds = array<i64: 32, 128>}, {pipeline_mode = #tpu.pipeline_mode<synchronous>, transform_indices = @transform_6, window_bounds = array<i64: 1, 128>}, {transform_indices = @transform_7, window_bounds = array<i64: 8, 1>}, {transform_indices = @transform_8, window_bounds = array<i64: 8, 1>}, {transform_indices = @transform_9, window_bounds = array<i64: 8, 128>}]} {
    %c0 = arith.constant 0 : index
    %c0_0 = arith.constant 0 : index
    %0 = vector.load %arg1[%c0, %c0_0] : memref<8x32xbf16, #tpu.memory_space<vmem>>, vector<8x32xbf16>
    %c0_1 = arith.constant 0 : index
    %c0_2 = arith.constant 0 : index
    %1 = vector.load %arg3[%c0_1, %c0_2] : memref<8x32xbf16, #tpu.memory_space<vmem>>, vector<8x32xbf16>
    %2 = arith.addf %0, %1 : vector<8x32xbf16>
    %c0_3 = arith.constant 0 : index
    %c0_4 = arith.constant 0 : index
    %3 = vector.load %arg2[%c0_3, %c0_4] : memref<8x32xbf16, #tpu.memory_space<vmem>>, vector<8x32xbf16>
    %c0_5 = arith.constant 0 : index
    %c0_6 = arith.constant 0 : index
    %4 = vector.load %arg4[%c0_5, %c0_6] : memref<8x32xbf16, #tpu.memory_space<vmem>>, vector<8x32xbf16>
    %5 = arith.addf %3, %4 : vector<8x32xbf16>
    %c0_7 = arith.constant 0 : index
    %c0_8 = arith.constant 0 : index
    %6 = vector.load %arg5[%c0_7, %c0_8] : memref<32x128xbf16, #tpu.memory_space<vmem>>, vector<32x128xbf16>
    %cst = arith.constant dense<0.000000e+00> : vector<8x128xf32>
    %7 = tpu.matmul %2, %6, %cst {dimension_numbers = #tpu.dot_dimension_numbers<[1], [0], [0], [1], [0, 0, 1, 1], [], []>} : vector<8x32xbf16>, vector<32x128xbf16>, vector<8x128xf32> -> vector<8x128xf32>
    %c0_9 = arith.constant 0 : index
    %c0_10 = arith.constant 0 : index
    %8 = vector.load %arg6[%c0_9, %c0_10] : memref<32x128xbf16, #tpu.memory_space<vmem>>, vector<32x128xbf16>
    %cst_11 = arith.constant dense<0.000000e+00> : vector<8x128xf32>
    %9 = tpu.matmul %5, %8, %cst_11 {dimension_numbers = #tpu.dot_dimension_numbers<[1], [0], [0], [1], [0, 0, 1, 1], [], []>} : vector<8x32xbf16>, vector<32x128xbf16>, vector<8x128xf32> -> vector<8x128xf32>
    %10 = arith.addf %7, %9 : vector<8x128xf32>
    %c0_12 = arith.constant 0 : index
    %c0_13 = arith.constant 0 : index
    %11 = vector.load %arg7[%c0_12, %c0_13] : memref<1x128xf32, #tpu.memory_space<vmem>>, vector<1x128xf32>
    %12 = vector.broadcast %11 : vector<1x128xf32> to vector<8x128xf32>
    %13 = arith.addf %10, %12 : vector<8x128xf32>
    %c0_14 = arith.constant 0 : index
    %c0_15 = arith.constant 0 : index
    %14 = vector.load %arg8[%c0_14, %c0_15] : memref<8x1xf32, #tpu.memory_space<vmem>>, vector<8x1xf32>
    %15 = vector.broadcast %14 : vector<8x1xf32> to vector<8x128xf32>
    %16 = arith.mulf %13, %15 : vector<8x128xf32>
    %c0_16 = arith.constant 0 : index
    %c0_17 = arith.constant 0 : index
    %17 = vector.load %arg9[%c0_16, %c0_17] : memref<8x1xf32, #tpu.memory_space<vmem>>, vector<8x1xf32>
    %18 = vector.broadcast %17 : vector<8x1xf32> to vector<8x128xf32>
    %19 = arith.addf %16, %18 : vector<8x128xf32>
    %c0_18 = arith.constant 0 : index
    %c0_19 = arith.constant 0 : index
    %20 = vector.load %arg10[%c0_18, %c0_19] : memref<8x128xf32, #tpu.memory_space<vmem>>, vector<8x128xf32>
    tpu.vector_store %arg10[%c0_18, %c0_19], %19 {strides = array<i32>} : memref<8x128xf32, #tpu.memory_space<vmem>>, vector<8x128xf32>,
    return
  }
  func.func @transform_0(%arg0: i32) -> (i32, i32) {
    %c0_i32 = arith.constant 0 : i32
    %c0_i32_0 = arith.constant 0 : i32
    return %arg0, %c0_i32 : i32, i32
  }
  func.func @transform_1(%arg0: i32) -> (i32, i32) {
    %c0_i32 = arith.constant 0 : i32
    %c0_i32_0 = arith.constant 0 : i32
    return %arg0, %c0_i32 : i32, i32
  }
  func.func @transform_2(%arg0: i32) -> (i32, i32) {
    %c0_i32 = arith.constant 0 : i32
    %c0_i32_0 = arith.constant 0 : i32
    return %arg0, %c0_i32 : i32, i32
  }
  func.func @transform_3(%arg0: i32) -> (i32, i32) {
    %c0_i32 = arith.constant 0 : i32
    %c0_i32_0 = arith.constant 0 : i32
    return %arg0, %c0_i32 : i32, i32
  }
  func.func @transform_4(%arg0: i32) -> (i32, i32) {
    %c0_i32 = arith.constant 0 : i32
    %c0_i32_0 = arith.constant 0 : i32
    %c0_i32_1 = arith.constant 0 : i32
    return %c0_i32, %c0_i32_0 : i32, i32
  }
  func.func @transform_5(%arg0: i32) -> (i32, i32) {
    %c0_i32 = arith.constant 0 : i32
    %c0_i32_0 = arith.constant 0 : i32
    %c0_i32_1 = arith.constant 0 : i32
    return %c0_i32, %c0_i32_0 : i32, i32
  }
  func.func @transform_6(%arg0: i32) -> (i32, i32) {
    %c0_i32 = arith.constant 0 : i32
    %c0_i32_0 = arith.constant 0 : i32
    %c0_i32_1 = arith.constant 0 : i32
    return %c0_i32, %c0_i32_0 : i32, i32
  }
  func.func @transform_7(%arg0: i32) -> (i32, i32) {
    %c0_i32 = arith.constant 0 : i32
    %c0_i32_0 = arith.constant 0 : i32
    return %arg0, %c0_i32 : i32, i32
  }
  func.func @transform_8(%arg0: i32) -> (i32, i32) {
    %c0_i32 = arith.constant 0 : i32
    %c0_i32_0 = arith.constant 0 : i32
    return %arg0, %c0_i32 : i32, i32
  }
  func.func @transform_9(%arg0: i32) -> (i32, i32) {
    %c0_i32 = arith.constant 0 : i32
    %c0_i32_0 = arith.constant 0 : i32
    return %arg0, %c0_i32 : i32, i32
  }
}

</mosaic_0001>

<llo_original>
// kernel: model_forward.1
$region0: #{model_forward.1}
  #allocation0 [shape = 'u32[]', space=smem, size = 0x4, offset = 0x4, fixed_abs, tag = 'smem constant byte address 0x4 - core index']
  #allocation1 [shape = 'u32[144,128]{1,0:T(1,128)}', space=vmem, size = 0x12000, scoped, tag = 'internal scratch']
  %s0 = inlined_call_operand.vmem [shape: bf16[8,32], index: 0, kind: input, shape index: {}]
  %s1 = inlined_call_operand.vmem [shape: bf16[8,32], index: 1, kind: input, shape index: {}]
  %s2 = inlined_call_operand.vmem [shape: bf16[8,32], index: 2, kind: input, shape index: {}]
  %s3 = inlined_call_operand.vmem [shape: bf16[8,32], index: 3, kind: input, shape index: {}]
  %s4 = inlined_call_operand.vmem [shape: bf16[32,128], index: 4, kind: input, shape index: {}]
  %s5 = inlined_call_operand.vmem [shape: bf16[32,128], index: 5, kind: input, shape index: {}]
  %s6 = inlined_call_operand.vmem [shape: f32[1,128], index: 6, kind: input, shape index: {}]
  %s7 = inlined_call_operand.vmem [shape: f32[8,1], index: 7, kind: input, shape index: {}]
  %s8 = inlined_call_operand.vmem [shape: f32[8,1], index: 8, kind: input, shape index: {}]
  %s9 = inlined_call_operand.hbm [shape: f32[8,128], index: 9, kind: output, shape index: {}]
  %s10 = sld [smem:[#allocation0]]
  $region46: #{model_forward.1} parent=0
    _
  %s12 = ssub.s32 1, %s10
  %s13 = scalar_select 0, %s12, %s10
  $region1: #{model_forward.1} parent=0
    #allocation2 [shape = 'u8[4096]{0}', space=vmem, size = 0x1000, scoped, tag = 'output window, operand 0, single buffered']
    #allocation3 [shape = 's32[1]{0}', space=sflag, size = 0x4, scoped, tag = 'scoped memory for model_forward.1']
    %14 = vsyncpa [#allocation3], 0
    // Predicated region
    $region2: #{model_forward.1} parent=1 // pred_check
      _
    $region3: #{model_forward.1} parent=1 // pred_check_branch
      %16 = sbr.rel (0) target = $region5
    $region4: #{model_forward.1} parent=1 // pred_region
      _
    $region5: #{model_forward.1} parent=1 // pred_fallthru
      _
    // Predicated region
    $region6: #{model_forward.1} parent=1 // pred_check
      _
    $region7: #{model_forward.1} parent=1 // pred_check_branch
      %18 = sbr.rel (0) target = $region9
    $region8: #{model_forward.1} parent=1 // pred_region
      _
    $region9: #{model_forward.1} parent=1 // pred_fallthru
      _
    // Predicated region
    $region10: #{model_forward.1} parent=1 // pred_check
      _
    $region11: #{model_forward.1} parent=1 // pred_check_branch
      %20 = sbr.rel (0) target = $region13
    $region12: #{model_forward.1} parent=1 // pred_region
      _
    $region13: #{model_forward.1} parent=1 // pred_fallthru
      _
    // Predicated region
    $region14: #{model_forward.1} parent=1 // pred_check
      _
    $region15: #{model_forward.1} parent=1 // pred_check_branch
      %22 = sbr.rel (0) target = $region17
    $region16: #{model_forward.1} parent=1 // pred_region
      _
    $region17: #{model_forward.1} parent=1 // pred_fallthru
      _
    // Predicated region
    $region18: #{model_forward.1} parent=1 // pred_check
      _
    $region19: #{model_forward.1} parent=1 // pred_check_branch
      %24 = sbr.rel (0) target = $region21
    $region20: #{model_forward.1} parent=1 // pred_region
      _
    $region21: #{model_forward.1} parent=1 // pred_fallthru
      _
    // Predicated region
    $region22: #{model_forward.1} parent=1 // pred_check
      _
    $region23: #{model_forward.1} parent=1 // pred_check_branch
      %26 = sbr.rel (0) target = $region25
    $region24: #{model_forward.1} parent=1 // pred_region
      _
    $region25: #{model_forward.1} parent=1 // pred_fallthru
      _
    // Predicated region
    $region26: #{model_forward.1} parent=1 // pred_check
      _
    $region27: #{model_forward.1} parent=1 // pred_check_branch
      %28 = sbr.rel (0) target = $region29
    $region28: #{model_forward.1} parent=1 // pred_region
      _
    $region29: #{model_forward.1} parent=1 // pred_fallthru
      _
    // Predicated region
    $region30: #{model_forward.1} parent=1 // pred_check
      _
    $region31: #{model_forward.1} parent=1 // pred_check_branch
      %30 = sbr.rel (0) target = $region33
    $region32: #{model_forward.1} parent=1 // pred_region
      _
    $region33: #{model_forward.1} parent=1 // pred_fallthru
      _
    // Predicated region
    $region34: #{model_forward.1} parent=1 // pred_check
      _
    $region35: #{model_forward.1} parent=1 // pred_check_branch
      %32 = sbr.rel (0) target = $region37
    $region36: #{model_forward.1} parent=1 // pred_region
      _
    $region37: #{model_forward.1} parent=1 // pred_fallthru
      _
    %v34 = vld [vmem:[%s0] sm:$0xf]
    %v35 = vld [vmem:[%s2] sm:$0xf]
    %v36 = vadd.bf16 %v34, %v35
    %v37 = vld [vmem:[%s1] sm:$0xf]
    %v38 = vld [vmem:[%s3] sm:$0xf]
    %v39 = vadd.bf16 %v37, %v38
    %v40 = vld [vmem:[%s4] sm:$0xf]
    %v41 = vld [vmem:[%s4 + $0x4] sm:$0xf]
    %v42 = vld [vmem:[%s4 + $0x8] sm:$0xf]
    %v43 = vld [vmem:[%s4 + $0xc] sm:$0xf]
    %v44 = vld [vmem:[%s5] sm:$0xf]
    %v45 = vld [vmem:[%s5 + $0x4] sm:$0xf]
    %v46 = vld [vmem:[%s5 + $0x8] sm:$0xf]
    %v47 = vld [vmem:[%s5 + $0xc] sm:$0xf]
    %v52 = vunpack.c.l.b16 %v44
    %v53 = vunpack.c.l.b16 %v45
    %v54 = vunpack.c.l.b16 %v46
    %v55 = vunpack.c.l.b16 %v47
    %v56 = vpack.c.b16 %v53, %v52
    %v57 = vpack.c.b16 %v55, %v54
    %vm60 = vcmask 261120
    %v62 = vsel %vm60, %v39, 0
    %64 = vmatprep.subr.bf16.mxu0 0
    %65 = vmatpush1.bf16.msra.mxu0 %v56
    %66 = vmatprep.subr.bf16.mxu0 0
    %67 = vmatpush1.bf16.msra.mxu0 %v57
    %68 = vmatprep.subr.bf16.mxu0 0
    %69 = vmatpush1.bf16.msra.mxu0 0
    %70 = vmatprep.subr.bf16.mxu0 0
    %71 = vmatpush1.bf16.msra.mxu0 0
    %72 = vmatprep.subr.bf16.mxu0 0
    %73 = vmatpush1.bf16.msra.mxu0 0
    %74 = vmatprep.subr.bf16.mxu0 0
    %75 = vmatpush1.bf16.msra.mxu0 0
    %76 = vmatprep.subr.bf16.mxu0 0
    %77 = vmatpush1.bf16.msra.mxu0 0
    %78 = vmatprep.subr.bf16.mxu0 0
    %79 = vmatpush1.bf16.msra.mxu0 0
    %80 = vmatprep.subr.bf16.mxu0 0
    %81 = vmatpush1.bf16.msra.mxu0 0
    %82 = vmatprep.subr.bf16.mxu0 0
    %83 = vmatpush1.bf16.msra.mxu0 0
    %84 = vmatprep.subr.bf16.mxu0 0
    %85 = vmatpush1.bf16.msra.mxu0 0
    %86 = vmatprep.subr.bf16.mxu0 0
    %87 = vmatpush1.bf16.msra.mxu0 0
    %88 = vmatprep.subr.bf16.mxu0 0
    %89 = vmatpush1.bf16.msra.mxu0 0
    %90 = vmatprep.subr.bf16.mxu0 0
    %91 = vmatpush1.bf16.msra.mxu0 0
    %92 = vmatprep.subr.bf16.mxu0 0
    %93 = vmatpush1.bf16.msra.mxu0 0
    %94 = vmatprep.subr.bf16.mxu0 0
    %95 = vmatpush1.bf16.msra.mxu0 0
    %96 = vmatprep.mubr.bf16.mxu0 0
    %97 = vmatmul.mubr.bf16.gmra.mrb[0].mxu0 %v62
    %v98 = vpop.f32.mrb[0].mxu0
    %v99 = vadd.f32 0.0, %v98
    %v100 = vpop.f32.mrb[0].mxu0
    %v101 = vpop.f32.mrb[0].mxu0
    %v102 = vpop.f32.mrb[0].mxu0
    %103 = vdwg.mxu0
    %v108 = vunpack.c.l.b16 %v40
    %v109 = vunpack.c.l.b16 %v41
    %v110 = vunpack.c.l.b16 %v42
    %v111 = vunpack.c.l.b16 %v43
    %v112 = vpack.c.b16 %v109, %v108
    %v113 = vpack.c.b16 %v111, %v110
    %v117 = vsel %vm60, %v36, 0
    %119 = vmatprep.subr.bf16.mxu0 0
    %120 = vmatpush1.bf16.msra.mxu0 %v112
    %121 = vmatprep.subr.bf16.mxu0 0
    %122 = vmatpush1.bf16.msra.mxu0 %v113
    %123 = vmatprep.subr.bf16.mxu0 0
    %124 = vmatpush1.bf16.msra.mxu0 0
    %125 = vmatprep.subr.bf16.mxu0 0
    %126 = vmatpush1.bf16.msra.mxu0 0
    %127 = vmatprep.subr.bf16.mxu0 0
    %128 = vmatpush1.bf16.msra.mxu0 0
    %129 = vmatprep.subr.bf16.mxu0 0
    %130 = vmatpush1.bf16.msra.mxu0 0
    %131 = vmatprep.subr.bf16.mxu0 0
    %132 = vmatpush1.bf16.msra.mxu0 0
    %133 = vmatprep.subr.bf16.mxu0 0
    %134 = vmatpush1.bf16.msra.mxu0 0
    %135 = vmatprep.subr.bf16.mxu0 0
    %136 = vmatpush1.bf16.msra.mxu0 0
    %137 = vmatprep.subr.bf16.mxu0 0
    %138 = vmatpush1.bf16.msra.mxu0 0
    %139 = vmatprep.subr.bf16.mxu0 0
    %140 = vmatpush1.bf16.msra.mxu0 0
    %141 = vmatprep.subr.bf16.mxu0 0
    %142 = vmatpush1.bf16.msra.mxu0 0
    %143 = vmatprep.subr.bf16.mxu0 0
    %144 = vmatpush1.bf16.msra.mxu0 0
    %145 = vmatprep.subr.bf16.mxu0 0
    %146 = vmatpush1.bf16.msra.mxu0 0
    %147 = vmatprep.subr.bf16.mxu0 0
    %148 = vmatpush1.bf16.msra.mxu0 0
    %149 = vmatprep.subr.bf16.mxu0 0
    %150 = vmatpush1.bf16.msra.mxu0 0
    %151 = vmatprep.mubr.bf16.mxu0 0
    %152 = vmatmul.mubr.bf16.gmra.mrb[0].mxu0 %v117
    %v153 = vpop.f32.mrb[0].mxu0
    %v154 = vadd.f32 %v99, %v153
    %v155 = vpop.f32.mrb[0].mxu0
    %v156 = vpop.f32.mrb[0].mxu0
    %v157 = vpop.f32.mrb[0].mxu0
    %158 = vdwg.mxu0
    %v159 = vld [vmem:[%s6] sm:$0x1]
    %v161 = vlaneseq
    %v162 = vshrl.u32 %v161, 7
    %v163 = vsub.s32 0, %v162
    %v164 = vrot.slane %v159, %v163
    %v166 = vadd.f32 %v154, %v164
    %v167 = vld [vmem:[%s7] sm:$0xff]
    %169 = vset.pattern.permute.xlu0 0
    %170 = vperm.xlu0 %169, %v167
    %v171 = vpop.permute.xlu0 %170
    %v173 = vmul.f32 %v166, %v171
    %v174 = vld [vmem:[%s8] sm:$0xff]
    %176 = vset.pattern.permute.xlu0 0
    %177 = vperm.xlu0 %176, %v174
    %v178 = vpop.permute.xlu0 %177
    %v180 = vadd.f32 %v173, %v178
    %181 = vst [vmem:[#allocation2] sm:$0xff] %v180
    // Predicated region
    $region38: #{model_forward.1} parent=1 // pred_check
      _
    $region39: #{model_forward.1} parent=1 // pred_check_branch
      %183 = sbr.rel (0) target = $region41
    $region40: #{model_forward.1} parent=1 // pred_region
      %s185 = ssub.s32 128, 128
      %186 = vsyncadd [#allocation3], %s185
      %s188 = sshll.u32 [#allocation2], 4
      %s189 = int_to_ptr.vmem [resolvable:$true] %s188
      %191 = dma.vmem_to_hbm [thread:$0]  %s189, 128, %s9, [#allocation3]
    $region41: #{model_forward.1} parent=1 // pred_fallthru
      _
    // Predicated region
    $region42: #{model_forward.1} parent=1 // pred_check
      _
    $region43: #{model_forward.1} parent=1 // pred_check_branch
      %193 = sbr.rel (0) target = $region45
    $region44: #{model_forward.1} parent=1 // pred_region
      %194 = dma.done [#allocation3], 128
    $region45: #{model_forward.1} parent=1 // pred_fallthru
      _
    %195 = vsyncpa [#allocation3], 1

</llo_original>
